<compile_context>
chip_gen: v6e
topology: v6e:2x2x1
jax: 0.10.0
libtpu: 0.0.40
codegen_flags: <defaults>
</compile_context>

<pallas_src>
import jax
import jax.numpy as jnp
from jax.experimental import pallas as pl
from jax.experimental.pallas import tpu as pltpu

_LANES = 128
_SAMPLES_PER_ROW = _LANES // 2   # 64 samples per 128-lane row (2 features each)


def _xor_mlp_kernel(params_ref, x_ref, o_ref):
    # params_ref: SMEM f32[9] = [w1_00, w1_01, w1_10, w1_11, b1_0, b1_1, w2_0, w2_1, b2]
    #             with w1[i, j] = weight from input feature i to hidden unit j.
    # x_ref: VMEM [TR, 128], lane-interleaved: lane 2k = x0, lane 2k+1 = x1 of sample.
    # o_ref: VMEM [TR, 128], y of each sample duplicated on its lane pair.
    x = x_ref[...].astype(jnp.float32)
    shape = x.shape

    w00 = params_ref[0]
    w01 = params_ref[1]
    w10 = params_ref[2]
    w11 = params_ref[3]
    b10 = params_ref[4]
    b11 = params_ref[5]
    w20 = params_ref[6]
    w21 = params_ref[7]
    b2 = params_ref[8]

    # Lane-parity bookkeeping (even lane holds x0 / hidden unit 0 of its sample).
    lane = jax.lax.broadcasted_iota(jnp.int32, shape, 1)
    even = jnp.bitwise_and(lane, 1) == 0
    partner = jnp.bitwise_xor(lane, 1)

    # Direction-proof partner swap: roll the lane indices alongside the data and
    # keep whichever roll actually delivered lane i^1 to lane i.  All XLU/VPU work,
    # negligible next to HBM traffic; avoids any host-side transpose of x.
    take_r1 = pltpu.roll(lane, 1, axis=1) == partner

    def swap_pairs(v):
        return jnp.where(take_r1,
                         pltpu.roll(v, 1, axis=1),
                         pltpu.roll(v, _LANES - 1, axis=1))

    def sigmoid(z):
        # 2 EUP pushes (exp, vrcp) + 1 VALU add per sigmoid.
        return pl.reciprocal(1.0 + jnp.exp(-z), approx=True)

    x_sw = swap_pairs(x)

    # Layer 1 (Linear(2,2) + Sigmoid), evaluated in the interleaved layout:
    # even lanes compute hidden unit 0, odd lanes compute hidden unit 1.
    w_self = jnp.where(even, w00, w11)
    w_cross = jnp.where(even, w10, w01)
    b1v = jnp.where(even, b10, b11)
    h = sigmoid(w_self * x + w_cross * x_sw + b1v)

    # Layer 2 (Linear(2,1) + Sigmoid): every lane ends up holding y for its sample.
    h_sw = swap_pairs(h)
    v_self = jnp.where(even, w20, w21)
    v_cross = jnp.where(even, w21, w20)
    y = sigmoid(v_self * h + v_cross * h_sw + b2)

    o_ref[...] = y.astype(o_ref.dtype)


def _pack_params(w1, b1, w2, b2):
    return jnp.concatenate([
        jnp.ravel(jnp.asarray(w1, jnp.float32)),
        jnp.ravel(jnp.asarray(b1, jnp.float32)),
        jnp.ravel(jnp.asarray(w2, jnp.float32)),
        jnp.ravel(jnp.asarray(b2, jnp.float32)),
    ])  # f32[9]


def xor_forward(x, w1, b1, w2, b2, *, block_rows=1024, min_pallas_batch=128):
    """Forward pass of XORModel.

    x : [B, 2]   (same layout as the nn.Module input)
    w1: [2, 2]   stored [in, out] (torch weight transposed); b1: [2]
    w2: [2, 1]   stored [in, out];                           b2: [1]
    returns [B, 1] in x's float dtype.
    """
    B = x.shape[0]
    out_dtype = x.dtype if jnp.issubdtype(x.dtype, jnp.floating) else jnp.float32

    # Tiny batches: a Pallas launch is pure dispatch overhead -- plain XLA wins.
    if B < min_pallas_batch:
        xf = x.astype(jnp.float32)
        h = jax.nn.sigmoid(xf @ jnp.asarray(w1, jnp.float32) + jnp.asarray(b1, jnp.float32))
        y = jax.nn.sigmoid(h @ jnp.asarray(w2, jnp.float32) + jnp.asarray(b2, jnp.float32))
        return y.astype(out_dtype)

    params = _pack_params(w1, b1, w2, b2)

    # Free lane-interleaved view of x: row-major [B, 2] flattens to
    # [x0_0, x1_0, x0_1, x1_1, ...]; reshaping to [rows, 128] packs 64 samples
    # per row with feature pairs on adjacent lanes.  No transpose / relayout pass.
    rows = -(-B // _SAMPLES_PER_ROW)
    tr = max(8, min(int(block_rows), -(-rows // 8) * 8))
    tr = (tr // 8) * 8
    rows_padded = -(-rows // tr) * tr

    flat = jnp.ravel(x)
    if not jnp.issubdtype(flat.dtype, jnp.floating):
        flat = flat.astype(jnp.float32)
    pad = rows_padded * _LANES - flat.shape[0]
    if pad:
        # TODO(synk): for very large unaligned B have the producer pre-pad/align the
        # batch; jnp.pad is an extra copy of the input here.
        flat = jnp.pad(flat, (0, pad))
    x_il = flat.reshape(rows_padded, _LANES)

    grid = (rows_padded // tr,)
    y_dup = pl.pallas_call(
        _xor_mlp_kernel,
        out_shape=jax.ShapeDtypeStruct((rows_padded, _LANES), out_dtype),
        grid=grid,
        in_specs=[
            pl.BlockSpec(memory_space=pltpu.MemorySpace.SMEM),     # packed params (f32[9])
            pl.BlockSpec((tr, _LANES), lambda i: (i, 0)),          # x tile (interleaved)
        ],
        out_specs=pl.BlockSpec((tr, _LANES), lambda i: (i, 0)),    # y tile (pair-duplicated)
        compiler_params=pltpu.CompilerParams(
            dimension_semantics=("parallel",),                     # v7x: shard batch over 2 TCs
        ),
    )(params, x_il)

    # Each sample's y is duplicated on its lane pair; keep the even-lane copy.
    return y_dup.reshape(-1, 2)[:B, 0:1]


def reference_forward(x, w1, b1, w2, b2):
    xf = x.astype(jnp.float32)
    h = jax.nn.sigmoid(xf @ w1 + b1)
    return jax.nn.sigmoid(h @ w2 + b2)


if __name__ == "__main__":
    key = jax.random.PRNGKey(0)
    kx, k1, k2, k3, k4 = jax.random.split(key, 5)

    # nn.Linear(2,2) / nn.Linear(2,1) parameters, stored as [in, out].
    w1 = jax.random.uniform(k1, (2, 2), jnp.float32, -0.7, 0.7)
    b1 = jax.random.uniform(k2, (2,), jnp.float32, -0.7, 0.7)
    w2 = jax.random.uniform(k3, (2, 1), jnp.float32, -0.7, 0.7)
    b2 = jax.random.uniform(k4, (1,), jnp.float32, -0.7, 0.7)

    # Tolerance: pl.reciprocal(approx=True) is ~1e-4-level relative; 5e-3 is ample.
    ATOL, RTOL = 5e-3, 1e-3

    # (1) Pallas path: batch large enough for dense tiles and a multi-step grid
    #     (rows=128, block_rows=32 -> grid=(4,)); real workloads use the 1024 default.
    B = 8192
    x = jax.random.uniform(kx, (B, 2), jnp.float32, -1.0, 1.0)
    out = jax.block_until_ready(xor_forward(x, w1, b1, w2, b2, block_rows=32))
    ref = reference_forward(x, w1, b1, w2, b2)
    assert out.shape == (B, 1), out.shape
    assert jnp.allclose(out, ref, atol=ATOL, rtol=RTOL), float(jnp.max(jnp.abs(out - ref)))

    # (2) Pallas path with a ragged batch (exercises tail padding).
    B2 = 1000
    x2 = jax.random.uniform(jax.random.PRNGKey(1), (B2, 2), jnp.float32, -1.0, 1.0)
    out2 = jax.block_until_ready(xor_forward(x2, w1, b1, w2, b2))
    ref2 = reference_forward(x2, w1, b1, w2, b2)
    assert out2.shape == (B2, 1), out2.shape
    assert jnp.allclose(out2, ref2, atol=ATOL, rtol=RTOL), float(jnp.max(jnp.abs(out2 - ref2)))

    # (3) Classic 4-sample XOR truth table: tiny batch takes the plain-XLA fast path.
    x_xor = jnp.array([[0.0, 0.0], [0.0, 1.0], [1.0, 0.0], [1.0, 1.0]], jnp.float32)
    out3 = jax.block_until_ready(xor_forward(x_xor, w1, b1, w2, b2))
    assert out3.shape == (4, 1), out3.shape
    assert jnp.allclose(out3, reference_forward(x_xor, w1, b1, w2, b2), atol=ATOL, rtol=RTOL)

    # TODO(synk): fit()/Adam/MSELoss are training-time ops, not part of the forward kernel.
    print("KERNEL_OK")
</pallas_src>

<mosaic_0001>
module attributes {stable_mosaic.version = 11 : i64} {
  func.func @_xor_mlp_kernel(%arg0: i32, %arg1: memref<9xf32, #tpu.memory_space<smem>>, %arg2: memref<32x128xf32, #tpu.memory_space<vmem>>, %arg3: memref<32x128xf32, #tpu.memory_space<vmem>>) attributes {dimension_semantics = [#tpu.dimension_semantics<parallel>], iteration_bounds = array<i64: 4>, scalar_prefetch = 0 : i64, scratch_operands = 0 : i64, tpu.core_type = #tpu.core_type<tc>, window_params = [{transform_indices = @transform_0, window_bounds = array<i64: 9>}, {transform_indices = @transform_1, window_bounds = array<i64: 32, 128>}, {transform_indices = @transform_2, window_bounds = array<i64: 32, 128>}]} {
    %c0 = arith.constant 0 : index
    %c0_0 = arith.constant 0 : index
    %0 = vector.load %arg2[%c0, %c0_0] : memref<32x128xf32, #tpu.memory_space<vmem>>, vector<32x128xf32>
    %c0_1 = arith.constant 0 : index
    %1 = memref.load %arg1[%c0_1] : memref<9xf32, #tpu.memory_space<smem>>
    %c1 = arith.constant 1 : index
    %2 = memref.load %arg1[%c1] : memref<9xf32, #tpu.memory_space<smem>>
    %c2 = arith.constant 2 : index
    %3 = memref.load %arg1[%c2] : memref<9xf32, #tpu.memory_space<smem>>
    %c3 = arith.constant 3 : index
    %4 = memref.load %arg1[%c3] : memref<9xf32, #tpu.memory_space<smem>>
    %c4 = arith.constant 4 : index
    %5 = memref.load %arg1[%c4] : memref<9xf32, #tpu.memory_space<smem>>
    %c5 = arith.constant 5 : index
    %6 = memref.load %arg1[%c5] : memref<9xf32, #tpu.memory_space<smem>>
    %c6 = arith.constant 6 : index
    %7 = memref.load %arg1[%c6] : memref<9xf32, #tpu.memory_space<smem>>
    %c7 = arith.constant 7 : index
    %8 = memref.load %arg1[%c7] : memref<9xf32, #tpu.memory_space<smem>>
    %c8 = arith.constant 8 : index
    %9 = memref.load %arg1[%c8] : memref<9xf32, #tpu.memory_space<smem>>
    %10 = tpu.iota {dimensions = array<i32: 1>} : vector<32x128xi32>
    %c1_i32 = arith.constant 1 : i32
    %11 = vector.broadcast %c1_i32 : i32 to vector<32x128xi32>
    %12 = arith.andi %10, %11 : vector<32x128xi32>
    %c0_i32 = arith.constant 0 : i32
    %13 = vector.broadcast %c0_i32 : i32 to vector<32x128xi32>
    %14 = arith.cmpi eq, %12, %13 : vector<32x128xi32>
    %c1_i32_2 = arith.constant 1 : i32
    %15 = vector.broadcast %c1_i32_2 : i32 to vector<32x128xi32>
    %16 = arith.xori %10, %15 : vector<32x128xi32>
    %c1_i32_3 = arith.constant 1 : i32
    %17 = tpu.dynamic_rotate %10 by %c1_i32_3 dim 1 : vector<32x128xi32>, i32 -> vector<32x128xi32>
    %18 = arith.cmpi eq, %17, %16 : vector<32x128xi32>
    %c1_i32_4 = arith.constant 1 : i32
    %19 = tpu.dynamic_rotate %0 by %c1_i32_4 dim 1 : vector<32x128xf32>, i32 -> vector<32x128xf32>
    %c127_i32 = arith.constant 127 : i32
    %20 = tpu.dynamic_rotate %0 by %c127_i32 dim 1 : vector<32x128xf32>, i32 -> vector<32x128xf32>
    %21 = arith.select %18, %19, %20 : vector<32x128xi1>, vector<32x128xf32>
    %22 = vector.broadcast %1 : f32 to vector<32x128xf32>
    %23 = vector.broadcast %4 : f32 to vector<32x128xf32>
    %24 = arith.select %14, %22, %23 : vector<32x128xi1>, vector<32x128xf32>
    %25 = vector.broadcast %3 : f32 to vector<32x128xf32>
    %26 = vector.broadcast %2 : f32 to vector<32x128xf32>
    %27 = arith.select %14, %25, %26 : vector<32x128xi1>, vector<32x128xf32>
    %28 = vector.broadcast %5 : f32 to vector<32x128xf32>
    %29 = vector.broadcast %6 : f32 to vector<32x128xf32>
    %30 = arith.select %14, %28, %29 : vector<32x128xi1>, vector<32x128xf32>
    %31 = arith.mulf %24, %0 : vector<32x128xf32>
    %32 = arith.mulf %27, %21 : vector<32x128xf32>
    %33 = arith.addf %31, %32 : vector<32x128xf32>
    %34 = arith.addf %33, %30 : vector<32x128xf32>
    %cst = arith.constant 0.000000e+00 : f32
    %35 = vector.broadcast %cst : f32 to vector<32x128xf32>
    %36 = arith.subf %35, %34 : vector<32x128xf32>
    %37 = math.exp %36 : vector<32x128xf32>
    %cst_5 = arith.constant 1.000000e+00 : f32
    %38 = vector.broadcast %cst_5 : f32 to vector<32x128xf32>
    %39 = arith.addf %38, %37 : vector<32x128xf32>
    %40 = tpu.reciprocal %39 {approx = true} : vector<32x128xf32> -> vector<32x128xf32>
    %c1_i32_6 = arith.constant 1 : i32
    %41 = tpu.dynamic_rotate %40 by %c1_i32_6 dim 1 : vector<32x128xf32>, i32 -> vector<32x128xf32>
    %c127_i32_7 = arith.constant 127 : i32
    %42 = tpu.dynamic_rotate %40 by %c127_i32_7 dim 1 : vector<32x128xf32>, i32 -> vector<32x128xf32>
    %43 = arith.select %18, %41, %42 : vector<32x128xi1>, vector<32x128xf32>
    %44 = vector.broadcast %7 : f32 to vector<32x128xf32>
    %45 = vector.broadcast %8 : f32 to vector<32x128xf32>
    %46 = arith.select %14, %44, %45 : vector<32x128xi1>, vector<32x128xf32>
    %47 = vector.broadcast %8 : f32 to vector<32x128xf32>
    %48 = vector.broadcast %7 : f32 to vector<32x128xf32>
    %49 = arith.select %14, %47, %48 : vector<32x128xi1>, vector<32x128xf32>
    %50 = arith.mulf %46, %40 : vector<32x128xf32>
    %51 = arith.mulf %49, %43 : vector<32x128xf32>
    %52 = arith.addf %50, %51 : vector<32x128xf32>
    %53 = vector.broadcast %9 : f32 to vector<32x128xf32>
    %54 = arith.addf %52, %53 : vector<32x128xf32>
    %cst_8 = arith.constant 0.000000e+00 : f32
    %55 = vector.broadcast %cst_8 : f32 to vector<32x128xf32>
    %56 = arith.subf %55, %54 : vector<32x128xf32>
    %57 = math.exp %56 : vector<32x128xf32>
    %cst_9 = arith.constant 1.000000e+00 : f32
    %58 = vector.broadcast %cst_9 : f32 to vector<32x128xf32>
    %59 = arith.addf %58, %57 : vector<32x128xf32>
    %60 = tpu.reciprocal %59 {approx = true} : vector<32x128xf32> -> vector<32x128xf32>
    %c0_10 = arith.constant 0 : index
    %c0_11 = arith.constant 0 : index
    %61 = vector.load %arg3[%c0_10, %c0_11] : memref<32x128xf32, #tpu.memory_space<vmem>>, vector<32x128xf32>
    tpu.vector_store %arg3[%c0_10, %c0_11], %60 {strides = array<i32>} : memref<32x128xf32, #tpu.memory_space<vmem>>, vector<32x128xf32>,
    return
  }
  func.func @transform_0(%arg0: i32) -> i32 {
    %c0_i32 = arith.constant 0 : i32
    %c0_i32_0 = arith.constant 0 : i32
    return %c0_i32 : i32
  }
  func.func @transform_1(%arg0: i32) -> (i32, i32) {
    %c0_i32 = arith.constant 0 : i32
    %c0_i32_0 = arith.constant 0 : i32
    return %arg0, %c0_i32 : i32, i32
  }
  func.func @transform_2(%arg0: i32) -> (i32, i32) {
    %c0_i32 = arith.constant 0 : i32
    %c0_i32_0 = arith.constant 0 : i32
    return %arg0, %c0_i32 : i32, i32
  }
}

</mosaic_0001>

<llo_original>
// kernel: tpu_custom_call.1
$region0: #{tpu_custom_call.1}
  #allocation0 [shape = 'u32[]', space=smem, size = 0x4, offset = 0x4, fixed_abs, tag = 'smem constant byte address 0x4 - core index']
  #allocation1 [shape = 'u32[144,128]{1,0:T(1,128)}', space=vmem, size = 0x12000, scoped, tag = 'internal scratch']
  %s0 = inlined_call_operand.hbm [shape: f32[9], index: 0, kind: input, shape index: {}]
  %s1 = inlined_call_operand.hbm [shape: f32[128,128], index: 1, kind: input, shape index: {}]
  %s2 = inlined_call_operand.hbm [shape: f32[128,128], index: 2, kind: output, shape index: {}]
  %s3 = sld [smem:[#allocation0]]
  $region49: #{tpu_custom_call.1} parent=0
    _
  %s5 = ssub.s32 1, %s3
  %s6 = scalar_select 0, %s5, %s3
  $region1: #{tpu_custom_call.1} parent=0
    #allocation2 [shape = 'u8[512]{0}', space=smem, size = 0x200, scoped, tag = 'input window, operand 0, single buffered']
    #allocation3 [shape = 's32[2]{0}', space=sflag, size = 0x8, scoped, tag = 'scoped memory for tpu_custom_call.1']
    #allocation4 [shape = 's32[2]{0}', space=sflag, size = 0x8, scoped, tag = 'scoped memory for tpu_custom_call.1']
    #allocation5 [shape = 's32[2]{0}', space=sflag, size = 0x8, scoped, tag = 'scoped memory for tpu_custom_call.1']
    #allocation6 [shape = 'u8[32768]{0}', space=vmem, size = 0x8000, scoped, tag = 'input window, operand 1']
    #allocation7 [shape = 'u8[32768]{0}', space=vmem, size = 0x8000, scoped, tag = 'output window, operand 0']
    %7 = vsyncpa [#allocation5], 0
    %8 = vsyncpa [#allocation3], 0
    %s9 = scalar_lea.sflag [#allocation3], 1
    %10 = vsyncpa %s9, 0
    %11 = vsyncpa [#allocation4], 0
    %s12 = scalar_lea.sflag [#allocation4], 1
    %13 = vsyncpa %s12, 0
    loop: start=0, step=1, limit=6
    $region2: #{tpu_custom_call.1} parent=1 // loop_pre_header
      _
    $region3: #{tpu_custom_call.1} parent=1 // loop_header
      %s15 = sphi 0, %s19
      %p16 = scmp.ge.s32.totalorder %s15, 6
      %s23 = sphi 0, %s23
      %s25 = sphi 0, %s23
      %s26 = sphi 0, %s25
      %s40 = sphi 0, %s26
      %s46 = sphi 0, %s48
      %s49 = sphi 0, %s46
      %s50 = sphi 0, %s49
      %s66 = sphi 0, %s50
      %s72 = sphi 0, %s74
      %s75 = sphi 0, %s72
      %s76 = sphi 0, %s75
      %s92 = sphi 0, %s76
    $region4: #{tpu_custom_call.1} parent=1 // loop_header_branch
      %18 = sbr.rel (%p16) target = $region8
    $region5: #{tpu_custom_call.1} parent=1 // loop_body
      %s20 = ssub.s32 %s15, 1
      %s21 = ssub.s32 %s15, 2
      %s22 = sadd.s32 %s15, 1
      %s24 = sadd.s32 %s23, 1
      %p27 = scmp.eq.s32.totalorder %s15, 3
      %p28 = scmp.ne.s32.totalorder %s23, %s25
      %p29 = scmp.eq.s32.totalorder %s15, 0
      %p30 = por %p28, %p29
      %p31 = scmp.ne.s32.totalorder %s23, %s25
      %p32 = scmp.eq.s32.totalorder %s20, 3
      %p33 = por %p31, %p32
      %p34 = scmp.ne.s32.totalorder %s25, %s26
      %p35 = scmp.eq.s32.totalorder %s20, 0
      %p36 = por %p34, %p35
      %p37 = scmp.ne.s32.totalorder %s25, %s26
      %p38 = scmp.eq.s32.totalorder %s21, 3
      %p39 = por %p37, %p38
      %p41 = scmp.ne.s32.totalorder %s26, %s40
      %p42 = scmp.eq.s32.totalorder %s21, 0
      %p43 = por %p41, %p42
      %s44 = ssub.s32 %s15, %s22
      %p45 = scmp.eq.s32.totalorder %s44, 0
      %s47 = sadd.s32 %s46, 1
      %s48 = scalar_select %p45, %s46, %s47
      %p51 = pneg %p45
      %p52 = scmp.eq.s32.totalorder %s15, 3
      %p53 = por %p51, %p52
      %p54 = scmp.ne.s32.totalorder %s46, %s49
      %p55 = scmp.eq.s32.totalorder %s15, 0
      %p56 = por %p54, %p55
      %p57 = scmp.ne.s32.totalorder %s46, %s49
      %p58 = scmp.eq.s32.totalorder %s20, 3
      %p59 = por %p57, %p58
      %p60 = scmp.ne.s32.totalorder %s49, %s50
      %p61 = scmp.eq.s32.totalorder %s20, 0
      %p62 = por %p60, %p61
      %p63 = scmp.ne.s32.totalorder %s49, %s50
      %p64 = scmp.eq.s32.totalorder %s21, 3
      %p65 = por %p63, %p64
      %p67 = scmp.ne.s32.totalorder %s50, %s66
      %p68 = scmp.eq.s32.totalorder %s21, 0
      %p69 = por %p67, %p68
      %s70 = ssub.s32 %s15, %s22
      %p71 = scmp.eq.s32.totalorder %s70, 0
      %s73 = sadd.s32 %s72, 1
      %s74 = scalar_select %p71, %s72, %s73
      %p77 = pneg %p71
      %p78 = scmp.eq.s32.totalorder %s15, 3
      %p79 = por %p77, %p78
      %p80 = scmp.ne.s32.totalorder %s72, %s75
      %p81 = scmp.eq.s32.totalorder %s15, 0
      %p82 = por %p80, %p81
      %p83 = scmp.ne.s32.totalorder %s72, %s75
      %p84 = scmp.eq.s32.totalorder %s20, 3
      %p85 = por %p83, %p84
      %p86 = scmp.ne.s32.totalorder %s75, %s76
      %p87 = scmp.eq.s32.totalorder %s20, 0
      %p88 = por %p86, %p87
      %p89 = scmp.ne.s32.totalorder %s75, %s76
      %p90 = scmp.eq.s32.totalorder %s21, 3
      %p91 = por %p89, %p90
      %p93 = scmp.ne.s32.totalorder %s76, %s92
      %p94 = scmp.eq.s32.totalorder %s21, 0
      %p95 = por %p93, %p94
      %p96 = scmp.le.s32.totalorder 1, %s15
      %p97 = scmp.lt.s32.totalorder %s15, 5
      %p98 = pnand %p96, %p97
      %p99 = pneg %p98
      // Predicated region
      $region9: #{tpu_custom_call.1} parent=5 // pred_check
        _
      $region10: #{tpu_custom_call.1} parent=5 // pred_check_branch
        %101 = sbr.rel (%p98) target = $region12
      $region11: #{tpu_custom_call.1} parent=5 // pred_region
        %s102 = ssub.s32 %s15, 1
        // Predicated region
        $region13: #{tpu_custom_call.1} parent=11 // pred_check
          %p103 = pneg %p36
        $region14: #{tpu_custom_call.1} parent=11 // pred_check_branch
          %105 = sbr.rel (%p103) target = $region16
        $region15: #{tpu_custom_call.1} parent=11 // pred_region
          %s107 = ssub.s32 16, 16
          %108 = vsyncadd [#allocation5], %s107
          %111 = dma.hbm_to_smem %s0, 16, [#allocation2], [#allocation5]
        $region16: #{tpu_custom_call.1} parent=11 // pred_fallthru
          _
      $region12: #{tpu_custom_call.1} parent=5 // pred_fallthru
        _
      %p112 = scmp.lt.s32.totalorder %s15, 4
      // Predicated region
      $region17: #{tpu_custom_call.1} parent=5 // pred_check
        %p113 = pneg %p112
      $region18: #{tpu_custom_call.1} parent=5 // pred_check_branch
        %115 = sbr.rel (%p113) target = $region20
      $region19: #{tpu_custom_call.1} parent=5 // pred_region
        // Predicated region
        $region21: #{tpu_custom_call.1} parent=19 // pred_check
          %p116 = pneg %p56
        $region22: #{tpu_custom_call.1} parent=19 // pred_check_branch
          %118 = sbr.rel (%p116) target = $region24
        $region23: #{tpu_custom_call.1} parent=19 // pred_region
          %s119 = sand.u32 %s46, 1
          %s120 = scalar_lea.sflag [#allocation3], %s119
          %s121 = sand.u32 %s46, 1
          %s122 = smul.addr %s121, 32
          %s123 = scalar_lea.vmem [#allocation6], %s122
          %s124 = smul.u32 4, %s15
          %s126 = ssub.s32 512, 512
          %127 = vsyncadd %s120, %s126
          %s128 = smul.addr %s124, 128
          %s129 = scalar_lea.hbm %s1, %s128
          %s130 = sshll.u32 %s123, 4
          %s131 = int_to_ptr.vmem [resolvable:$true] %s130
          %136 = dma.hbm_to_vmem [thread:$0]  %s129, 512, %s131, %s120, 128, 128, 8
        $region24: #{tpu_custom_call.1} parent=19 // pred_fallthru
          _
      $region20: #{tpu_custom_call.1} parent=5 // pred_fallthru
        _
      %p137 = scmp.le.s32.totalorder 1, %s15
      %p138 = scmp.lt.s32.totalorder %s15, 5
      %p139 = pnand %p137, %p138
      %p140 = pneg %p139
      // Predicated region
      $region25: #{tpu_custom_call.1} parent=5 // pred_check
        _
      $region26: #{tpu_custom_call.1} parent=5 // pred_check_branch
        %142 = sbr.rel (%p139) target = $region28
      $region27: #{tpu_custom_call.1} parent=5 // pred_region
        %s143 = ssub.s32 %s15, 1
        // Predicated region
        $region29: #{tpu_custom_call.1} parent=27 // pred_check
          %p144 = pneg %p36
        $region30: #{tpu_custom_call.1} parent=27 // pred_check_branch
          %146 = sbr.rel (%p144) target = $region32
        $region31: #{tpu_custom_call.1} parent=27 // pred_region
          %147 = dma.done [#allocation5], 16
        $region32: #{tpu_custom_call.1} parent=27 // pred_fallthru
          _
        %s148 = sand.u32 %s49, 1
        %s149 = scalar_lea.sflag [#allocation3], %s148
        %s150 = sand.u32 %s49, 1
        %s151 = smul.addr %s150, 32
        %s152 = scalar_lea.vmem [#allocation6], %s151
        // Predicated region
        $region33: #{tpu_custom_call.1} parent=27 // pred_check
          %p153 = pneg %p62
        $region34: #{tpu_custom_call.1} parent=27 // pred_check_branch
          %155 = sbr.rel (%p153) target = $region36
        $region35: #{tpu_custom_call.1} parent=27 // pred_region
          %156 = dma.done %s149, 512
        $region36: #{tpu_custom_call.1} parent=27 // pred_fallthru
          _
        %157 = sfence
        %p158 = pneg %p36
        %p159 = pneg %p33
        %s160 = sand.u32 %s49, 1
        %s161 = scalar_lea.sflag [#allocation3], %s160
        %s162 = sand.u32 %s49, 1
        %s163 = smul.addr %s162, 32
        %s164 = scalar_lea.vmem [#allocation6], %s163
        %p165 = pneg %p62
        %p166 = pneg %p59
        %p167 = pneg %p88
        %p168 = pneg %p85
        %s169 = sand.u32 %s75, 1
        %s170 = scalar_lea.sflag [#allocation4], %s169
        %s171 = sand.u32 %s75, 1
        %s172 = smul.addr %s171, 32
        %s173 = scalar_lea.vmem [#allocation7], %s172
        %s174 = smul.u32 4, %s20
        %s175 = smul.u32 4, %s20
        %v176 = vld [vmem:[%s152] sm:$0xff]
        %v177 = vld [vmem:[%s152 + $0x8] sm:$0xff]
        %v178 = vld [vmem:[%s152 + $0x10] sm:$0xff]
        %v179 = vld [vmem:[%s152 + $0x18] sm:$0xff]
        %s180 = sld [smem:[#allocation2]]
        %s181 = sld [smem:[#allocation2 + $0x1]]
        %s182 = sld [smem:[#allocation2 + $0x2]]
        %s183 = sld [smem:[#allocation2 + $0x3]]
        %s184 = sld [smem:[#allocation2 + $0x4]]
        %s185 = sld [smem:[#allocation2 + $0x5]]
        %s186 = sld [smem:[#allocation2 + $0x6]]
        %s187 = sld [smem:[#allocation2 + $0x7]]
        %s188 = sld [smem:[#allocation2 + $0x8]]
        %v189 = vlaneseq
        %v190 = vand.u32 %v189, 127
        %v191 = vand.u32 %v190, 1
        %vm192 = vcmp.eq.s32.totalorder %v191, 0
        %v193 = vxor.u32 %v190, 1
        %194 = vrot.lane.b32.xlu0 %v190, 1
        %v195 = vpop.permute.xlu0 %194
        %vm196 = vcmp.eq.s32.totalorder %v195, %v193
        %197 = vrot.lane.b32.xlu0 %v176, 1
        %v198 = vpop.permute.xlu0 %197
        %199 = vrot.lane.b32.xlu0 %v177, 1
        %v200 = vpop.permute.xlu0 %199
        %201 = vrot.lane.b32.xlu0 %v178, 1
        %v202 = vpop.permute.xlu0 %201
        %203 = vrot.lane.b32.xlu0 %v179, 1
        %v204 = vpop.permute.xlu0 %203
        %205 = vrot.lane.b32.xlu0 %v176, 127
        %v206 = vpop.permute.xlu0 %205
        %207 = vrot.lane.b32.xlu0 %v177, 127
        %v208 = vpop.permute.xlu0 %207
        %209 = vrot.lane.b32.xlu0 %v178, 127
        %v210 = vpop.permute.xlu0 %209
        %211 = vrot.lane.b32.xlu0 %v179, 127
        %v212 = vpop.permute.xlu0 %211
        %v213 = vsel %vm196, %v198, %v206
        %v214 = vsel %vm196, %v200, %v208
        %v215 = vsel %vm196, %v202, %v210
        %v216 = vsel %vm196, %v204, %v212
        %v217 = vstv %s180
        %v218 = vstv %s183
        %v219 = vsel %vm192, %v217, %v218
        %v220 = vstv %s182
        %v221 = vstv %s181
        %v222 = vsel %vm192, %v220, %v221
        %v223 = vstv %s184
        %v224 = vstv %s185
        %v225 = vsel %vm192, %v223, %v224
        %v226 = vmul.f32 %v219, %v176
        %v227 = vmul.f32 %v219, %v177
        %v228 = vmul.f32 %v219, %v178
        %v229 = vmul.f32 %v219, %v179
        %v230 = vmul.f32 %v222, %v213
        %v231 = vmul.f32 %v222, %v214
        %v232 = vmul.f32 %v222, %v215
        %v233 = vmul.f32 %v222, %v216
        %v234 = vadd.f32 %v226, %v230
        %v235 = vadd.f32 %v227, %v231
        %v236 = vadd.f32 %v228, %v232
        %v237 = vadd.f32 %v229, %v233
        %v238 = vadd.f32 %v234, %v225
        %v239 = vadd.f32 %v235, %v225
        %v240 = vadd.f32 %v236, %v225
        %v241 = vadd.f32 %v237, %v225
        %v242 = vsub.f32 0.0, %v238
        %v243 = vsub.f32 0.0, %v239
        %v244 = vsub.f32 0.0, %v240
        %v245 = vsub.f32 0.0, %v241
        %v246 = vmul.f32 %v242, 1.442695
        %v247 = vpow.pop %v246
        %v248 = vmul.f32 %v243, 1.442695
        %v249 = vpow.pop %v248
        %v250 = vmul.f32 %v244, 1.442695
        %v251 = vpow.pop %v250
        %v252 = vmul.f32 %v245, 1.442695
        %v253 = vpow.pop %v252
        %v254 = vadd.f32 %v247, 1.0
        %v255 = vadd.f32 %v249, 1.0
        %v256 = vadd.f32 %v251, 1.0
        %v257 = vadd.f32 %v253, 1.0
        %v258 = vrcp.pop %v254
        %v259 = vrcp.pop %v255
        %v260 = vrcp.pop %v256
        %v261 = vrcp.pop %v257
        %262 = vrot.lane.b32.xlu0 %v258, 1
        %v263 = vpop.permute.xlu0 %262
        %264 = vrot.lane.b32.xlu0 %v259, 1
        %v265 = vpop.permute.xlu0 %264
        %266 = vrot.lane.b32.xlu0 %v260, 1
        %v267 = vpop.permute.xlu0 %266
        %268 = vrot.lane.b32.xlu0 %v261, 1
        %v269 = vpop.permute.xlu0 %268
        %270 = vrot.lane.b32.xlu0 %v258, 127
        %v271 = vpop.permute.xlu0 %270
        %272 = vrot.lane.b32.xlu0 %v259, 127
        %v273 = vpop.permute.xlu0 %272
        %274 = vrot.lane.b32.xlu0 %v260, 127
        %v275 = vpop.permute.xlu0 %274
        %276 = vrot.lane.b32.xlu0 %v261, 127
        %v277 = vpop.permute.xlu0 %276
        %v278 = vsel %vm196, %v263, %v271
        %v279 = vsel %vm196, %v265, %v273
        %v280 = vsel %vm196, %v267, %v275
        %v281 = vsel %vm196, %v269, %v277
        %v282 = vstv %s186
        %v283 = vstv %s187
        %v284 = vsel %vm192, %v282, %v283
        %v285 = vsel %vm192, %v283, %v282
        %v286 = vmul.f32 %v284, %v258
        %v287 = vmul.f32 %v284, %v259
        %v288 = vmul.f32 %v284, %v260
        %v289 = vmul.f32 %v284, %v261
        %v290 = vmul.f32 %v285, %v278
        %v291 = vmul.f32 %v285, %v279
        %v292 = vmul.f32 %v285, %v280
        %v293 = vmul.f32 %v285, %v281
        %v294 = vadd.f32 %v286, %v290
        %v295 = vadd.f32 %v287, %v291
        %v296 = vadd.f32 %v288, %v292
        %v297 = vadd.f32 %v289, %v293
        %v298 = vstv %s188
        %v299 = vadd.f32 %v294, %v298
        %v300 = vadd.f32 %v295, %v298
        %v301 = vadd.f32 %v296, %v298
        %v302 = vadd.f32 %v297, %v298
        %v303 = vsub.f32 0.0, %v299
        %v304 = vsub.f32 0.0, %v300
        %v305 = vsub.f32 0.0, %v301
        %v306 = vsub.f32 0.0, %v302
        %v307 = vmul.f32 %v303, 1.442695
        %v308 = vpow.pop %v307
        %v309 = vmul.f32 %v304, 1.442695
        %v310 = vpow.pop %v309
        %v311 = vmul.f32 %v305, 1.442695
        %v312 = vpow.pop %v311
        %v313 = vmul.f32 %v306, 1.442695
        %v314 = vpow.pop %v313
        %v315 = vadd.f32 %v308, 1.0
        %v316 = vadd.f32 %v310, 1.0
        %v317 = vadd.f32 %v312, 1.0
        %v318 = vadd.f32 %v314, 1.0
        %v319 = vrcp.pop %v315
        %v320 = vrcp.pop %v316
        %v321 = vrcp.pop %v317
        %v322 = vrcp.pop %v318
        %323 = vst [vmem:[%s173] sm:$0xff] %v319
        %324 = vst [vmem:[%s173 + $0x8] sm:$0xff] %v320
        %325 = vst [vmem:[%s173 + $0x10] sm:$0xff] %v321
        %326 = vst [vmem:[%s173 + $0x18] sm:$0xff] %v322
        %s327 = sand.u32 %s75, 1
        %s328 = scalar_lea.sflag [#allocation4], %s327
        %s329 = sand.u32 %s75, 1
        %s330 = smul.addr %s329, 32
        %s331 = scalar_lea.vmem [#allocation7], %s330
        // Predicated region
        $region37: #{tpu_custom_call.1} parent=27 // pred_check
          %p332 = pneg %p85
        $region38: #{tpu_custom_call.1} parent=27 // pred_check_branch
          %334 = sbr.rel (%p332) target = $region40
        $region39: #{tpu_custom_call.1} parent=27 // pred_region
          %s335 = smul.u32 4, %s20
          %s337 = ssub.s32 512, 512
          %338 = vsyncadd %s328, %s337
          %s339 = smul.addr %s335, 128
          %s340 = scalar_lea.hbm %s2, %s339
          %s341 = sshll.u32 %s331, 4
          %s342 = int_to_ptr.vmem [resolvable:$true] %s341
          %347 = dma.vmem_to_hbm [thread:$0]  %s342, 512, %s340, %s328, 128, 128, 8
        $region40: #{tpu_custom_call.1} parent=27 // pred_fallthru
          _
      $region28: #{tpu_custom_call.1} parent=5 // pred_fallthru
        _
      %p348 = scmp.le.s32.totalorder 2, %s15
      // Predicated region
      $region41: #{tpu_custom_call.1} parent=5 // pred_check
        %p349 = pneg %p348
      $region42: #{tpu_custom_call.1} parent=5 // pred_check_branch
        %351 = sbr.rel (%p349) target = $region44
      $region43: #{tpu_custom_call.1} parent=5 // pred_region
        %s352 = ssub.s32 %s15, 2
        // Predicated region
        $region45: #{tpu_custom_call.1} parent=43 // pred_check
          %p353 = pneg %p91
        $region46: #{tpu_custom_call.1} parent=43 // pred_check_branch
          %355 = sbr.rel (%p353) target = $region48
        $region47: #{tpu_custom_call.1} parent=43 // pred_region
          %s356 = sand.u32 %s76, 1
          %s357 = scalar_lea.sflag [#allocation4], %s356
          %s358 = sand.u32 %s76, 1
          %s359 = smul.addr %s358, 32
          %s360 = scalar_lea.vmem [#allocation7], %s359
          %361 = dma.done %s357, 512
        $region48: #{tpu_custom_call.1} parent=43 // pred_fallthru
          _
      $region44: #{tpu_custom_call.1} parent=5 // pred_fallthru
        _
    $region6: #{tpu_custom_call.1} parent=1 // loop_footer
      %s19 = sadd.s32 1, %s15
    $region7: #{tpu_custom_call.1} parent=1 // loop_footer_branch
      %14 = sbr.rel target = $region3
    $region8: #{tpu_custom_call.1} parent=1 // loop_exit
      _
    %362 = vsyncpa [#allocation3], 1
    %s363 = scalar_lea.sflag [#allocation3], 1
    %364 = vsyncpa %s363, 1
    %365 = vsyncpa [#allocation4], 1
    %s366 = scalar_lea.sflag [#allocation4], 1
    %367 = vsyncpa %s366, 1
    %368 = vsyncpa [#allocation5], 1
    %s369 = scalar_lea.sflag [#allocation5], 1
    %370 = vsyncpa %s369, 1

</llo_original>
